<compile_context>
chip_gen: v7x
topology: tpu7x:2x2x1
jax: 0.10.0
libtpu: 0.0.40
codegen_flags: <defaults>
</compile_context>

<pallas_src>
import functools

import jax
import jax.numpy as jnp
from jax import lax
from jax.experimental import pallas as pl
from jax.experimental.pallas import tpu as pltpu


def _round_up(x, m):
    return ((x + m - 1) // m) * m


def _final_adaln_kernel(h_ref, scale1_ref, shift_ref, o_ref, *, eps):
    # FP32 LayerNorm (no affine) over the last dim of a (1, tS, H) tile,
    # single pass: var = E[x^2] - mean^2, clamped at 0 to avoid cancellation NaNs.
    h = h_ref[...].astype(jnp.float32)                        # (1, tS, H)
    inv_h = jnp.float32(1.0 / h.shape[-1])
    mean = jnp.sum(h, axis=-1, keepdims=True) * inv_h
    mean_sq = jnp.sum(h * h, axis=-1, keepdims=True) * inv_h
    var = jnp.maximum(mean_sq - mean * mean, 0.0)
    inv_std = lax.rsqrt(var + eps)
    normed = ((h - mean) * inv_std).astype(o_ref.dtype)       # back to hidden dtype

    # Modulate in hidden dtype; "+1" was folded into scale1 in the wrapper.
    o_ref[...] = normed * scale1_ref[...] + shift_ref[...]


def final_ada_layer_norm(hidden_states, condition, weight, bias, *, eps=1e-5,
                         target_block_bytes=4 * 1024 * 1024):
    """hidden_states: (B, S, H); condition: (B, C); weight: (2H, C); bias: (2H,)."""
    B, S, H = hidden_states.shape
    dt = hidden_states.dtype
    itemsize = dt.itemsize

    # ---- conditioning path hoisted to XLA (tiny GEMM, not worth the MXU) ----
    cond_act = jax.nn.silu(condition.astype(jnp.float32)).astype(dt)   # .to(hidden.dtype)
    emb = jnp.dot(cond_act, weight.T.astype(dt),
                  preferred_element_type=jnp.float32) + bias.astype(jnp.float32)
    scale1 = (emb[:, :H].astype(dt) + jnp.asarray(1, dt)).reshape(B, 1, H)  # 1 + scale
    shift = emb[:, H:].astype(dt).reshape(B, 1, H)

    # ---- sequence tiling: size tS from a block-byte budget, sublane-aligned --
    pack = 8 if itemsize >= 4 else (16 if itemsize == 2 else 32)
    S_ceil = _round_up(S, pack)
    row_bytes = H * itemsize
    tS = _round_up(max(1, target_block_bytes // max(1, row_bytes)), pack)
    tS = min(tS, S_ceil)

    # Make sure a 2-TensorCore part gets at least two grid steps when possible.
    if B * pl.cdiv(S, tS) < 2 and S > pack:
        tS = max(pack, _round_up(-(-S // 2), pack))

    # ---- VMEM budget (generation-aware) --------------------------------------
    try:
        vmem_cap = int(getattr(pltpu.get_tpu_info(), "vmem_capacity_bytes",
                               64 * 1024 * 1024))
    except Exception:
        vmem_cap = 64 * 1024 * 1024                       # conservative (v7x)
    vmem_budget = min(int(vmem_cap * 0.75), 100 * 1024 * 1024)

    def _tile_vmem(ts):
        blk = ts * H * itemsize
        # 2x in + 2x out (double-buffered) + ~3 f32 intermediates + scale/shift rows.
        return 4 * blk + 3 * ts * H * 4 + 4 * H * itemsize

    while _tile_vmem(tS) > vmem_budget and tS > pack:
        tS = max(pack, _round_up(tS // 2, pack))

    grid = (B, pl.cdiv(S, tS))   # ragged S handled by masked partial boundary blocks

    kernel = functools.partial(_final_adaln_kernel, eps=eps)

    out = pl.pallas_call(
        kernel,
        out_shape=jax.ShapeDtypeStruct((B, S, H), dt),
        grid_spec=pltpu.PrefetchScalarGridSpec(
            num_scalar_prefetch=0,
            grid=grid,
            in_specs=[
                pl.BlockSpec((1, tS, H), lambda b, s: (b, s, 0)),   # hidden tile
                pl.BlockSpec((1, 1, H), lambda b, s: (b, 0, 0)),    # (1 + scale) row
                pl.BlockSpec((1, 1, H), lambda b, s: (b, 0, 0)),    # shift row
            ],
            out_specs=pl.BlockSpec((1, tS, H), lambda b, s: (b, s, 0)),
        ),
        compiler_params=pltpu.CompilerParams(
            dimension_semantics=("parallel", "parallel"),
            vmem_limit_bytes=int(vmem_budget),
        ),
        cost_estimate=pl.CostEstimate(
            flops=int(7 * B * S * H),
            transcendentals=int(B * S),
            bytes_accessed=int(2 * B * S * H * itemsize),
        ),
    )(hidden_states, scale1, shift)

    return out


def _reference(hidden_states, condition, weight, bias, eps=1e-5):
    dt = hidden_states.dtype
    H = hidden_states.shape[-1]
    c = jax.nn.silu(condition.astype(jnp.float32)).astype(dt)
    emb = jnp.dot(c, weight.T.astype(dt)) + bias.astype(dt)
    scale, shift = emb[:, :H], emb[:, H:]
    h = hidden_states.astype(jnp.float32)
    mean = jnp.mean(h, axis=-1, keepdims=True)
    var = jnp.mean((h - mean) ** 2, axis=-1, keepdims=True)
    normed = ((h - mean) * lax.rsqrt(var + eps)).astype(dt)
    return normed * (1 + scale)[:, None, :] + shift[:, None, :]


if __name__ == "__main__":
    key = jax.random.PRNGKey(0)
    k1, k2, k3, k4 = jax.random.split(key, 4)

    # ---- small f32 sanity test ----------------------------------------------
    B, S, H, C = 2, 8, 32, 16
    hidden_states = jax.random.normal(k1, (B, S, H), dtype=jnp.float32)
    condition = jax.random.normal(k2, (B, C), dtype=jnp.float32)
    weight = jax.random.normal(k3, (2 * H, C), dtype=jnp.float32) * 0.02
    bias = jax.random.normal(k4, (2 * H,), dtype=jnp.float32) * 0.02

    out = jax.block_until_ready(
        final_ada_layer_norm(hidden_states, condition, weight, bias, eps=1e-5))
    ref = _reference(hidden_states, condition, weight, bias, eps=1e-5)
    assert out.shape == (B, S, H)
    assert jnp.allclose(out, ref, atol=1e-4, rtol=1e-4), "f32 mismatch vs reference"

    # ---- bf16, ragged S: exercises the masked partial boundary block --------
    B2, S2, H2, C2 = 1, 600, 256, 128
    h2 = jax.random.normal(k1, (B2, S2, H2), dtype=jnp.float32).astype(jnp.bfloat16)
    c2 = jax.random.normal(k2, (B2, C2), dtype=jnp.float32).astype(jnp.bfloat16)
    w2 = (jax.random.normal(k3, (2 * H2, C2), dtype=jnp.float32) * 0.02).astype(jnp.bfloat16)
    b2 = (jax.random.normal(k4, (2 * H2,), dtype=jnp.float32) * 0.02).astype(jnp.bfloat16)

    out2 = jax.block_until_ready(final_ada_layer_norm(h2, c2, w2, b2, eps=1e-5))
    ref2 = _reference(h2, c2, w2, b2, eps=1e-5)
    assert out2.shape == (B2, S2, H2)
    assert jnp.allclose(out2.astype(jnp.float32), ref2.astype(jnp.float32),
                        atol=3e-2, rtol=3e-2), "bf16 mismatch vs reference"

    print("KERNEL_OK")
</pallas_src>

<mosaic_0001>
module attributes {stable_mosaic.version = 11 : i64} {
  func.func @_final_adaln_kernel(%arg0: i32, %arg1: i32, %arg2: memref<1x8x32xf32, #tpu.memory_space<vmem>>, %arg3: memref<1x1x32xf32, #tpu.memory_space<vmem>>, %arg4: memref<1x1x32xf32, #tpu.memory_space<vmem>>, %arg5: memref<1x8x32xf32, #tpu.memory_space<vmem>>) attributes {dimension_semantics = [#tpu.dimension_semantics<parallel>, #tpu.dimension_semantics<parallel>], iteration_bounds = array<i64: 2, 1>, scalar_prefetch = 0 : i64, scratch_operands = 0 : i64, tpu.core_type = #tpu.core_type<tc>, window_params = [{transform_indices = @transform_0, window_bounds = array<i64: 1, 8, 32>}, {transform_indices = @transform_1, window_bounds = array<i64: 1, 1, 32>}, {transform_indices = @transform_2, window_bounds = array<i64: 1, 1, 32>}, {transform_indices = @transform_3, window_bounds = array<i64: 1, 8, 32>}]} {
    %c0 = arith.constant 0 : index
    %c0_0 = arith.constant 0 : index
    %c0_1 = arith.constant 0 : index
    %0 = vector.load %arg2[%c0, %c0_0, %c0_1] : memref<1x8x32xf32, #tpu.memory_space<vmem>>, vector<1x8x32xf32>
    %cst = arith.constant dense<0.000000e+00> : vector<1x8xf32>
    %1 = vector.multi_reduction <add>, %0, %cst [2] : vector<1x8x32xf32> to vector<1x8xf32>
    %2 = vector.shape_cast %1 : vector<1x8xf32> to vector<1x8x1xf32>
    %cst_2 = arith.constant 3.125000e-02 : f32
    %3 = vector.broadcast %cst_2 : f32 to vector<1x8x1xf32>
    %4 = arith.mulf %2, %3 : vector<1x8x1xf32>
    %5 = arith.mulf %0, %0 : vector<1x8x32xf32>
    %cst_3 = arith.constant dense<0.000000e+00> : vector<1x8xf32>
    %6 = vector.multi_reduction <add>, %5, %cst_3 [2] : vector<1x8x32xf32> to vector<1x8xf32>
    %7 = vector.shape_cast %6 : vector<1x8xf32> to vector<1x8x1xf32>
    %cst_4 = arith.constant 3.125000e-02 : f32
    %8 = vector.broadcast %cst_4 : f32 to vector<1x8x1xf32>
    %9 = arith.mulf %7, %8 : vector<1x8x1xf32>
    %10 = arith.mulf %4, %4 : vector<1x8x1xf32>
    %11 = arith.subf %9, %10 : vector<1x8x1xf32>
    %cst_5 = arith.constant 0.000000e+00 : f32
    %12 = vector.broadcast %cst_5 : f32 to vector<1x8x1xf32>
    %13 = arith.maximumf %11, %12 : vector<1x8x1xf32>
    %cst_6 = arith.constant 9.99999974E-6 : f32
    %14 = vector.broadcast %cst_6 : f32 to vector<1x8x1xf32>
    %15 = arith.addf %13, %14 : vector<1x8x1xf32>
    %16 = math.rsqrt %15 : vector<1x8x1xf32>
    %17 = vector.broadcast %4 : vector<1x8x1xf32> to vector<1x8x32xf32>
    %18 = arith.subf %0, %17 : vector<1x8x32xf32>
    %19 = vector.broadcast %16 : vector<1x8x1xf32> to vector<1x8x32xf32>
    %20 = arith.mulf %18, %19 : vector<1x8x32xf32>
    %c0_7 = arith.constant 0 : index
    %c0_8 = arith.constant 0 : index
    %c0_9 = arith.constant 0 : index
    %21 = vector.load %arg3[%c0_7, %c0_8, %c0_9] : memref<1x1x32xf32, #tpu.memory_space<vmem>>, vector<1x1x32xf32>
    %22 = vector.broadcast %21 : vector<1x1x32xf32> to vector<1x8x32xf32>
    %23 = arith.mulf %20, %22 : vector<1x8x32xf32>
    %c0_10 = arith.constant 0 : index
    %c0_11 = arith.constant 0 : index
    %c0_12 = arith.constant 0 : index
    %24 = vector.load %arg4[%c0_10, %c0_11, %c0_12] : memref<1x1x32xf32, #tpu.memory_space<vmem>>, vector<1x1x32xf32>
    %25 = vector.broadcast %24 : vector<1x1x32xf32> to vector<1x8x32xf32>
    %26 = arith.addf %23, %25 : vector<1x8x32xf32>
    %c0_13 = arith.constant 0 : index
    %c0_14 = arith.constant 0 : index
    %c0_15 = arith.constant 0 : index
    %27 = vector.load %arg5[%c0_13, %c0_14, %c0_15] : memref<1x8x32xf32, #tpu.memory_space<vmem>>, vector<1x8x32xf32>
    tpu.vector_store %arg5[%c0_13, %c0_14, %c0_15], %26 {strides = array<i32>} : memref<1x8x32xf32, #tpu.memory_space<vmem>>, vector<1x8x32xf32>,
    return
  }
  func.func @transform_0(%arg0: i32, %arg1: i32) -> (i32, i32, i32) {
    %c0_i32 = arith.constant 0 : i32
    %c0_i32_0 = arith.constant 0 : i32
    return %arg0, %arg1, %c0_i32 : i32, i32, i32
  }
  func.func @transform_1(%arg0: i32, %arg1: i32) -> (i32, i32, i32) {
    %c0_i32 = arith.constant 0 : i32
    %c0_i32_0 = arith.constant 0 : i32
    %c0_i32_1 = arith.constant 0 : i32
    return %arg0, %c0_i32, %c0_i32_0 : i32, i32, i32
  }
  func.func @transform_2(%arg0: i32, %arg1: i32) -> (i32, i32, i32) {
    %c0_i32 = arith.constant 0 : i32
    %c0_i32_0 = arith.constant 0 : i32
    %c0_i32_1 = arith.constant 0 : i32
    return %arg0, %c0_i32, %c0_i32_0 : i32, i32, i32
  }
  func.func @transform_3(%arg0: i32, %arg1: i32) -> (i32, i32, i32) {
    %c0_i32 = arith.constant 0 : i32
    %c0_i32_0 = arith.constant 0 : i32
    return %arg0, %arg1, %c0_i32 : i32, i32, i32
  }
}

</mosaic_0001>

<llo_original>
// kernel: tpu_custom_call.1
$region0: #{tpu_custom_call.1}
  #allocation0 [shape = 'u32[]', space=smem, size = 0x4, offset = 0x4, fixed_abs, tag = 'smem constant byte address 0x4 - core index']
  #allocation1 [shape = 'u32[144,128]{1,0:T(1,128)}', space=vmem, size = 0x12000, scoped, tag = 'internal scratch']
  %s0 = inlined_call_operand.hbm [shape: f32[2,8,32], index: 0, kind: input, shape index: {}]
  %s1 = inlined_call_operand.vmem [shape: f32[2,1,32], index: 1, kind: input, shape index: {}]
  %s2 = inlined_call_operand.vmem [shape: f32[2,1,32], index: 2, kind: input, shape index: {}]
  %s3 = inlined_call_operand.hbm [shape: f32[2,8,32], index: 3, kind: output, shape index: {}]
  %s4 = sld [smem:[#allocation0]]
  $region49: #{tpu_custom_call.1} parent=0
    _
  %s6 = ssub.s32 1, %s4
  %s7 = scalar_select 0, %s6, %s4
  $region1: #{tpu_custom_call.1} parent=0
    #allocation2 [shape = 'u8[8192]{0}', space=vmem, size = 0x2000, scoped, tag = 'input window, operand 0']
    #allocation3 [shape = 's32[2]{0}', space=sflag, size = 0x8, scoped, tag = 'scoped memory for tpu_custom_call.1']
    #allocation4 [shape = 's32[2]{0}', space=sflag, size = 0x8, scoped, tag = 'scoped memory for tpu_custom_call.1']
    #allocation5 [shape = 'u8[8192]{0}', space=vmem, size = 0x2000, scoped, tag = 'output window, operand 0']
    %8 = vsyncpa [#allocation3], 0
    %s9 = scalar_lea.sflag [#allocation3], 1
    %10 = vsyncpa %s9, 0
    %11 = vsyncpa [#allocation4], 0
    %s12 = scalar_lea.sflag [#allocation4], 1
    %13 = vsyncpa %s12, 0
    loop: start=0, step=1, limit=4
    $region2: #{tpu_custom_call.1} parent=1 // loop_pre_header
      _
    $region3: #{tpu_custom_call.1} parent=1 // loop_header
      %s15 = sphi 0, %s19
      %p16 = scmp.ge.s32.totalorder %s15, 4
      %s22 = sphi 0, %s34
      %s23 = sphi 0, %s30
      %s24 = sphi 0, %s22
      %s25 = sphi 0, %s23
      %s26 = sphi 0, %s24
      %s27 = sphi 0, %s25
      %s39 = sphi 0, %s41
      %s42 = sphi 0, %s39
      %s43 = sphi 0, %s42
      %s59 = sphi 0, %s43
      %s65 = sphi 0, %s67
      %s68 = sphi 0, %s65
      %s69 = sphi 0, %s68
      %s85 = sphi 0, %s69
      %s91 = sphi 0, %s93
      %s94 = sphi 0, %s91
      %s95 = sphi 0, %s94
      %s111 = sphi 0, %s95
      %s119 = sphi 0, %s121
      %s122 = sphi 0, %s119
      %s123 = sphi 0, %s122
      %s139 = sphi 0, %s123
    $region4: #{tpu_custom_call.1} parent=1 // loop_header_branch
      %18 = sbr.rel (%p16) target = $region8
    $region5: #{tpu_custom_call.1} parent=1 // loop_body
      %s20 = ssub.s32 %s15, 1
      %s21 = ssub.s32 %s15, 2
      %s28 = sadd.s32 1, %s23
      %p29 = scmp.ge.s32.totalorder %s28, 1
      %s30 = scalar_select %p29, 0, %s28
      %s31 = sadd.s32 1, %s22
      %s32 = scalar_select %p29, %s31, %s22
      %p33 = scmp.ge.s32.totalorder %s32, 2
      %s34 = scalar_select %p33, 0, %s32
      %s35 = ssub.s32 %s22, %s34
      %s36 = ssub.s32 %s23, %s30
      %s37 = sor.u32 %s35, %s36
      %p38 = scmp.eq.s32.totalorder %s37, 0
      %s40 = sadd.s32 %s39, 1
      %s41 = scalar_select %p38, %s39, %s40
      %p44 = pneg %p38
      %p45 = scmp.eq.s32.totalorder %s15, 1
      %p46 = por %p44, %p45
      %p47 = scmp.ne.s32.totalorder %s39, %s42
      %p48 = scmp.eq.s32.totalorder %s15, 0
      %p49 = por %p47, %p48
      %p50 = scmp.ne.s32.totalorder %s39, %s42
      %p51 = scmp.eq.s32.totalorder %s20, 1
      %p52 = por %p50, %p51
      %p53 = scmp.ne.s32.totalorder %s42, %s43
      %p54 = scmp.eq.s32.totalorder %s20, 0
      %p55 = por %p53, %p54
      %p56 = scmp.ne.s32.totalorder %s42, %s43
      %p57 = scmp.eq.s32.totalorder %s21, 1
      %p58 = por %p56, %p57
      %p60 = scmp.ne.s32.totalorder %s43, %s59
      %p61 = scmp.eq.s32.totalorder %s21, 0
      %p62 = por %p60, %p61
      %s63 = ssub.s32 %s22, %s34
      %p64 = scmp.eq.s32.totalorder %s63, 0
      %s66 = sadd.s32 %s65, 1
      %s67 = scalar_select %p64, %s65, %s66
      %p70 = pneg %p64
      %p71 = scmp.eq.s32.totalorder %s15, 1
      %p72 = por %p70, %p71
      %p73 = scmp.ne.s32.totalorder %s65, %s68
      %p74 = scmp.eq.s32.totalorder %s15, 0
      %p75 = por %p73, %p74
      %p76 = scmp.ne.s32.totalorder %s65, %s68
      %p77 = scmp.eq.s32.totalorder %s20, 1
      %p78 = por %p76, %p77
      %p79 = scmp.ne.s32.totalorder %s68, %s69
      %p80 = scmp.eq.s32.totalorder %s20, 0
      %p81 = por %p79, %p80
      %p82 = scmp.ne.s32.totalorder %s68, %s69
      %p83 = scmp.eq.s32.totalorder %s21, 1
      %p84 = por %p82, %p83
      %p86 = scmp.ne.s32.totalorder %s69, %s85
      %p87 = scmp.eq.s32.totalorder %s21, 0
      %p88 = por %p86, %p87
      %s89 = ssub.s32 %s22, %s34
      %p90 = scmp.eq.s32.totalorder %s89, 0
      %s92 = sadd.s32 %s91, 1
      %s93 = scalar_select %p90, %s91, %s92
      %p96 = pneg %p90
      %p97 = scmp.eq.s32.totalorder %s15, 1
      %p98 = por %p96, %p97
      %p99 = scmp.ne.s32.totalorder %s91, %s94
      %p100 = scmp.eq.s32.totalorder %s15, 0
      %p101 = por %p99, %p100
      %p102 = scmp.ne.s32.totalorder %s91, %s94
      %p103 = scmp.eq.s32.totalorder %s20, 1
      %p104 = por %p102, %p103
      %p105 = scmp.ne.s32.totalorder %s94, %s95
      %p106 = scmp.eq.s32.totalorder %s20, 0
      %p107 = por %p105, %p106
      %p108 = scmp.ne.s32.totalorder %s94, %s95
      %p109 = scmp.eq.s32.totalorder %s21, 1
      %p110 = por %p108, %p109
      %p112 = scmp.ne.s32.totalorder %s95, %s111
      %p113 = scmp.eq.s32.totalorder %s21, 0
      %p114 = por %p112, %p113
      %s115 = ssub.s32 %s22, %s34
      %s116 = ssub.s32 %s23, %s30
      %s117 = sor.u32 %s115, %s116
      %p118 = scmp.eq.s32.totalorder %s117, 0
      %s120 = sadd.s32 %s119, 1
      %s121 = scalar_select %p118, %s119, %s120
      %p124 = pneg %p118
      %p125 = scmp.eq.s32.totalorder %s15, 1
      %p126 = por %p124, %p125
      %p127 = scmp.ne.s32.totalorder %s119, %s122
      %p128 = scmp.eq.s32.totalorder %s15, 0
      %p129 = por %p127, %p128
      %p130 = scmp.ne.s32.totalorder %s119, %s122
      %p131 = scmp.eq.s32.totalorder %s20, 1
      %p132 = por %p130, %p131
      %p133 = scmp.ne.s32.totalorder %s122, %s123
      %p134 = scmp.eq.s32.totalorder %s20, 0
      %p135 = por %p133, %p134
      %p136 = scmp.ne.s32.totalorder %s122, %s123
      %p137 = scmp.eq.s32.totalorder %s21, 1
      %p138 = por %p136, %p137
      %p140 = scmp.ne.s32.totalorder %s123, %s139
      %p141 = scmp.eq.s32.totalorder %s21, 0
      %p142 = por %p140, %p141
      %p143 = scmp.le.s32.totalorder 1, %s15
      %p144 = scmp.lt.s32.totalorder %s15, 3
      %p145 = pnand %p143, %p144
      %p146 = pneg %p145
      // Predicated region
      $region9: #{tpu_custom_call.1} parent=5 // pred_check
        _
      $region10: #{tpu_custom_call.1} parent=5 // pred_check_branch
        %148 = sbr.rel (%p145) target = $region12
      $region11: #{tpu_custom_call.1} parent=5 // pred_region
        %s149 = ssub.s32 %s15, 1
      $region12: #{tpu_custom_call.1} parent=5 // pred_fallthru
        _
      %p150 = scmp.lt.s32.totalorder %s15, 2
      // Predicated region
      $region13: #{tpu_custom_call.1} parent=5 // pred_check
        %p151 = pneg %p150
      $region14: #{tpu_custom_call.1} parent=5 // pred_check_branch
        %153 = sbr.rel (%p151) target = $region16
      $region15: #{tpu_custom_call.1} parent=5 // pred_region
        // Predicated region
        $region17: #{tpu_custom_call.1} parent=15 // pred_check
          %p154 = pneg %p49
        $region18: #{tpu_custom_call.1} parent=15 // pred_check_branch
          %156 = sbr.rel (%p154) target = $region20
        $region19: #{tpu_custom_call.1} parent=15 // pred_region
          %s157 = sand.u32 %s39, 1
          %s158 = scalar_lea.sflag [#allocation3], %s157
          %s159 = sand.u32 %s39, 1
          %s160 = smul.addr %s159, 8
          %s161 = scalar_lea.vmem [#allocation2], %s160
          %s163 = ssub.s32 128, 128
          %164 = vsyncadd %s158, %s163
          %s165 = sadd.s32 %s23, %s22
          %s166 = smul.addr %s165, 128
          %s167 = scalar_lea.hbm %s0, %s166
          %s169 = sshll.u32 %s161, 4
          %s170 = int_to_ptr.vmem [resolvable:$true] %s169
          %172 = dma.hbm_to_vmem [thread:$0]  %s167, 128, %s170, %s158
        $region20: #{tpu_custom_call.1} parent=15 // pred_fallthru
          _
        // Predicated region
        $region21: #{tpu_custom_call.1} parent=15 // pred_check
          %p173 = pneg %p75
        $region22: #{tpu_custom_call.1} parent=15 // pred_check_branch
          %175 = sbr.rel (%p173) target = $region24
        $region23: #{tpu_custom_call.1} parent=15 // pred_region
          %p176 = scmp.lt.s32.totalorder %s22, 1
          %s177 = scalar_select %p176, %s22, 1
          %s178 = scalar_lea.vmem %s1, %s177
        $region24: #{tpu_custom_call.1} parent=15 // pred_fallthru
          _
        // Predicated region
        $region25: #{tpu_custom_call.1} parent=15 // pred_check
          %p179 = pneg %p101
        $region26: #{tpu_custom_call.1} parent=15 // pred_check_branch
          %181 = sbr.rel (%p179) target = $region28
        $region27: #{tpu_custom_call.1} parent=15 // pred_region
          %p182 = scmp.lt.s32.totalorder %s22, 1
          %s183 = scalar_select %p182, %s22, 1
          %s184 = scalar_lea.vmem %s2, %s183
        $region28: #{tpu_custom_call.1} parent=15 // pred_fallthru
          _
      $region16: #{tpu_custom_call.1} parent=5 // pred_fallthru
        _
      %p185 = scmp.le.s32.totalorder 1, %s15
      %p186 = scmp.lt.s32.totalorder %s15, 3
      %p187 = pnand %p185, %p186
      %p188 = pneg %p187
      // Predicated region
      $region29: #{tpu_custom_call.1} parent=5 // pred_check
        _
      $region30: #{tpu_custom_call.1} parent=5 // pred_check_branch
        %190 = sbr.rel (%p187) target = $region32
      $region31: #{tpu_custom_call.1} parent=5 // pred_region
        %s191 = ssub.s32 %s15, 1
        %s192 = sand.u32 %s42, 1
        %s193 = scalar_lea.sflag [#allocation3], %s192
        %s194 = sand.u32 %s42, 1
        %s195 = smul.addr %s194, 8
        %s196 = scalar_lea.vmem [#allocation2], %s195
        // Predicated region
        $region33: #{tpu_custom_call.1} parent=31 // pred_check
          %p197 = pneg %p55
        $region34: #{tpu_custom_call.1} parent=31 // pred_check_branch
          %199 = sbr.rel (%p197) target = $region36
        $region35: #{tpu_custom_call.1} parent=31 // pred_region
          %200 = dma.done %s193, 128
        $region36: #{tpu_custom_call.1} parent=31 // pred_fallthru
          _
        %s201 = sand.u32 %s42, 1
        %s202 = scalar_lea.sflag [#allocation3], %s201
        %s203 = sand.u32 %s42, 1
        %s204 = smul.addr %s203, 8
        %s205 = scalar_lea.vmem [#allocation2], %s204
        %p206 = pneg %p55
        %p207 = pneg %p52
        %p208 = scmp.lt.s32.totalorder %s24, 1
        %s209 = scalar_select %p208, %s24, 1
        %s210 = scalar_lea.vmem %s1, %s209
        %p211 = pneg %p81
        %p212 = pneg %p78
        %p213 = scmp.lt.s32.totalorder %s24, 1
        %s214 = scalar_select %p213, %s24, 1
        %s215 = scalar_lea.vmem %s2, %s214
        %p216 = pneg %p107
        %p217 = pneg %p104
        %p218 = pneg %p135
        %p219 = pneg %p132
        %s220 = sand.u32 %s122, 1
        %s221 = scalar_lea.sflag [#allocation4], %s220
        %s222 = sand.u32 %s122, 1
        %s223 = smul.addr %s222, 8
        %s224 = scalar_lea.vmem [#allocation5], %s223
        %p225 = scmp.lt.s32.totalorder %s24, 1
        %s226 = scalar_select %p225, %s24, 1
        %s227 = scalar_lea.vmem %s1, %s226
        %p228 = scmp.lt.s32.totalorder %s24, 1
        %s229 = scalar_select %p228, %s24, 1
        %s230 = scalar_lea.vmem %s2, %s229
        %v231 = vld [vmem:[%s196] sm:$0xff]
        %vm232 = vcmask 261120
        %v233 = vsel %vm232, %v231, 0.0
        %234 = vadd.xlane.f32.xlu0 %v233
        %v235 = vpop.xlane.xlu0 %234
        %v236 = vmul.f32 %v235, 0.03125
        %v237 = vmul.f32 %v231, %v231
        %v238 = vsel %vm232, %v237, 0.0
        %239 = vadd.xlane.f32.xlu0 %v238
        %v240 = vpop.xlane.xlu0 %239
        %v241 = vmul.f32 %v240, 0.03125
        %v242 = vmul.f32 %v236, %v236
        %v243 = vsub.f32 %v241, %v242
        %v244 = vmax.f32 %v243, 0.0
        %v245 = vadd.f32 %v244, 1e-05
        %v246 = vrsqrt.pop %v245
        %v247 = vsub.f32 %v231, %v236
        %v248 = vmul.f32 %v247, %v246
        %v249 = vld [vmem:[%s227] sm:$0x1]
        %v251 = vlaneseq
        %v252 = vshrl.u32 %v251, 7
        %v253 = vsub.s32 0, %v252
        %v254 = vrot.slane %v249, %v253
        %v256 = vmul.f32 %v248, %v254
        %v257 = vld [vmem:[%s230] sm:$0x1]
        %v259 = vlaneseq
        %v260 = vshrl.u32 %v259, 7
        %v261 = vsub.s32 0, %v260
        %v262 = vrot.slane %v257, %v261
        %v264 = vadd.f32 %v256, %v262
        %265 = vst.msk [vmem:[%s224] sm:$0xff] %vm232, %v264
        %s266 = sand.u32 %s122, 1
        %s267 = scalar_lea.sflag [#allocation4], %s266
        %s268 = sand.u32 %s122, 1
        %s269 = smul.addr %s268, 8
        %s270 = scalar_lea.vmem [#allocation5], %s269
        // Predicated region
        $region37: #{tpu_custom_call.1} parent=31 // pred_check
          %p271 = pneg %p132
        $region38: #{tpu_custom_call.1} parent=31 // pred_check_branch
          %273 = sbr.rel (%p271) target = $region40
        $region39: #{tpu_custom_call.1} parent=31 // pred_region
          %s275 = ssub.s32 128, 128
          %276 = vsyncadd %s267, %s275
          %s277 = sadd.s32 %s25, %s24
          %s278 = smul.addr %s277, 128
          %s279 = scalar_lea.hbm %s3, %s278
          %s281 = sshll.u32 %s270, 4
          %s282 = int_to_ptr.vmem [resolvable:$true] %s281
          %284 = dma.vmem_to_hbm [thread:$0]  %s282, 128, %s279, %s267
        $region40: #{tpu_custom_call.1} parent=31 // pred_fallthru
          _
      $region32: #{tpu_custom_call.1} parent=5 // pred_fallthru
        _
      %p285 = scmp.le.s32.totalorder 2, %s15
      // Predicated region
      $region41: #{tpu_custom_call.1} parent=5 // pred_check
        %p286 = pneg %p285
      $region42: #{tpu_custom_call.1} parent=5 // pred_check_branch
        %288 = sbr.rel (%p286) target = $region44
      $region43: #{tpu_custom_call.1} parent=5 // pred_region
        %s289 = ssub.s32 %s15, 2
        // Predicated region
        $region45: #{tpu_custom_call.1} parent=43 // pred_check
          %p290 = pneg %p138
        $region46: #{tpu_custom_call.1} parent=43 // pred_check_branch
          %292 = sbr.rel (%p290) target = $region48
        $region47: #{tpu_custom_call.1} parent=43 // pred_region
          %s293 = sand.u32 %s123, 1
          %s294 = scalar_lea.sflag [#allocation4], %s293
          %s295 = sand.u32 %s123, 1
          %s296 = smul.addr %s295, 8
          %s297 = scalar_lea.vmem [#allocation5], %s296
          %298 = dma.done %s294, 128
        $region48: #{tpu_custom_call.1} parent=43 // pred_fallthru
          _
      $region44: #{tpu_custom_call.1} parent=5 // pred_fallthru
        _
    $region6: #{tpu_custom_call.1} parent=1 // loop_footer
      %s19 = sadd.s32 1, %s15
    $region7: #{tpu_custom_call.1} parent=1 // loop_footer_branch
      %14 = sbr.rel target = $region3
    $region8: #{tpu_custom_call.1} parent=1 // loop_exit
      _
    %299 = vsyncpa [#allocation3], 1
    %s300 = scalar_lea.sflag [#allocation3], 1
    %301 = vsyncpa %s300, 1
    %302 = vsyncpa [#allocation4], 1
    %s303 = scalar_lea.sflag [#allocation4], 1
    %304 = vsyncpa %s303, 1

</llo_original>
